<compile_context>
chip_gen: v5e
topology: v5e:2x2
jax: 0.10.0
libtpu: 0.0.40
codegen_flags: <defaults>
</compile_context>

<pallas_src>
import jax
import jax.numpy as jnp
from jax.experimental import pallas as pl
from jax.experimental.pallas import tpu as pltpu


def _round_up(v, m):
    return -(-v // m) * m


def _make_kernel(local_dim, write_local, compute_dtype):
    def kernel(x_ref, wf_ref, bl_ref, ba_ref, *out_refs):
        # x_ref:  (C, TM)   f32   -- one batch element's pixel tile
        # wf_ref: (LDP, C)  bf16  -- [local conv rows; attention row; zero pad]
        # bl_ref: (LD, 1)   f32   -- local bias (broadcast over TM)
        # ba_ref: (1, 1)    f32   -- attention bias
        # out_refs: (local_ref,) att_ref, attd_ref
        # Cast in VMEM (no extra HBM round trip); MXU bf16 in / f32 acc.
        x = x_ref[...].astype(compute_dtype)
        fused = jnp.dot(wf_ref[...], x, preferred_element_type=jnp.float32)

        local = fused[:local_dim, :] + bl_ref[...]                  # (LD, TM)
        att = jax.nn.sigmoid(fused[local_dim:local_dim + 1, :] + ba_ref[...])

        if write_local:
            local_ref, att_ref, attd_ref = out_refs
            local_ref[...] = local.astype(local_ref.dtype)
        else:
            att_ref, attd_ref = out_refs
        att_ref[...] = att.astype(att_ref.dtype)
        attd_ref[...] = (local * att).astype(attd_ref.dtype)

    return kernel


def local_feature_extractor(x_nchw, w_local, b_local, w_att, b_att, *,
                            out_dtype=None,
                            return_local=True,
                            compute_dtype=jnp.bfloat16,
                            max_tm=2048,
                            min_grid_steps=4):
    """Pallas implementation of LocalFeatureExtractor.forward.

    Args:
      x_nchw:  (N, C, H, W) float32
      w_local: (local_dim, C) — Conv2d weight with the 1x1 kernel squeezed
      b_local: (local_dim,)
      w_att:   (1, C)
      b_att:   (1,)
      out_dtype: output dtype; None -> x.dtype (module semantics). bf16 halves
        HBM write traffic on this write-bound kernel.
      return_local: if False, skip writing local_features (attention_map and
        attended_features only) — drops ~half the write traffic.
    Returns:
      (local_features, attention_map, attended_features) in NCHW (or the last
      two when return_local=False).
    """
    N, C, H, W = x_nchw.shape
    LD = w_local.shape[0]
    HW = H * W
    out_dtype = x_nchw.dtype if out_dtype is None else jnp.dtype(out_dtype)

    # NCHW -> (N, C, HW) is a free reshape; x stays f32 in HBM (cast happens
    # inside the kernel on the VMEM tile).
    x_flat = x_nchw.reshape(N, C, HW)

    # Fuse attention conv into the local conv weight: rows [0:LD] local,
    # row LD attention, zero-padded to a multiple of 8 sublanes so the
    # post-matmul row slices stay cheap.
    LDP = _round_up(LD + 1, 8)
    wf = jnp.concatenate(
        [w_local.astype(compute_dtype),
         w_att.reshape(1, C).astype(compute_dtype),
         jnp.zeros((LDP - LD - 1, C), dtype=compute_dtype)], axis=0)
    bl = b_local.reshape(LD, 1).astype(jnp.float32)
    ba = b_att.reshape(1, 1).astype(jnp.float32)

    # ---- per-chip tile sizing ---------------------------------------------
    try:
        vmem_cap = int(pltpu.get_tpu_info().vmem_capacity_bytes)
    except Exception:
        vmem_cap = 64 * 1024 * 1024          # conservative (v7x per-TC)
    vmem_cap = min(vmem_cap, 128 * 1024 * 1024)
    usable = max(16 * 1024 * 1024, vmem_cap - 16 * 1024 * 1024)

    itemsize_x = jnp.dtype(x_nchw.dtype).itemsize
    itemsize_w = jnp.dtype(compute_dtype).itemsize
    itemsize_o = jnp.dtype(out_dtype).itemsize
    out_rows = (2 * LD if return_local else LD) + 8   # att row pads to 8 sublanes
    # Double-buffered bytes per 128 output lanes (x tile + output tiles).
    bytes_per_col = 2 * 128 * (C * itemsize_x + out_rows * itemsize_o)
    # Weights/biases have a constant index_map but are still double-buffered.
    weight_bytes = 2 * (LDP * C * itemsize_w + (LD + 1 + 8) * 4)

    max_cols = max(1, (usable - weight_bytes) // bytes_per_col)
    tm = int(min(max_tm, 128 * max_cols))
    if tm >= HW:
        tm = HW                                  # full spatial axis in one tile
    else:
        tm = max(128, (tm // 128) * 128)         # (8,128) lane constraint

    # Megacore balance (v7x has 2 TCs sharded over "parallel" axes): prefer a
    # smaller tile over leaving a core idle when the grid would be tiny.
    while tm > 128 and N * pl.cdiv(HW, tm) < min_grid_steps:
        tm = max(128, ((tm // 2) // 128) * 128)

    grid = (N, pl.cdiv(HW, tm))

    tm_pad = _round_up(tm, 128)
    needed = weight_bytes + 2 * tm_pad * (C * itemsize_x + out_rows * itemsize_o)
    vmem_limit_bytes = int(min(vmem_cap - 2 * 1024 * 1024,
                               max(32 * 1024 * 1024, needed + 4 * 1024 * 1024)))

    # Advisory cost estimate reflecting actual dtypes/traffic.
    M = N * HW
    n_out_rows_written = (2 * LD if return_local else LD) + 1
    cost = pl.CostEstimate(
        flops=2 * M * C * (LD + 1),
        transcendentals=M,                                   # sigmoid
        bytes_accessed=(M * C * itemsize_x                   # x read (f32)
                        + LDP * C * itemsize_w + (LD + 1) * 4
                        + M * n_out_rows_written * itemsize_o))

    out_shapes = []
    out_specs = []
    if return_local:
        out_shapes.append(jax.ShapeDtypeStruct((N, LD, HW), out_dtype))
        out_specs.append(pl.BlockSpec((None, LD, tm), lambda n, j: (n, 0, j)))
    out_shapes.append(jax.ShapeDtypeStruct((N, 1, HW), out_dtype))
    out_specs.append(pl.BlockSpec((None, 1, tm), lambda n, j: (n, 0, j)))
    out_shapes.append(jax.ShapeDtypeStruct((N, LD, HW), out_dtype))
    out_specs.append(pl.BlockSpec((None, LD, tm), lambda n, j: (n, 0, j)))

    outs = pl.pallas_call(
        _make_kernel(LD, return_local, compute_dtype),
        out_shape=tuple(out_shapes),
        grid_spec=pltpu.PrefetchScalarGridSpec(
            num_scalar_prefetch=0,
            grid=grid,
            in_specs=[
                # x tile: (1, C, tm), batch squeezed -> kernel sees (C, tm)
                pl.BlockSpec((None, C, tm), lambda n, j: (n, 0, j)),
                pl.BlockSpec((LDP, C), lambda n, j: (0, 0)),   # resident weights
                pl.BlockSpec((LD, 1), lambda n, j: (0, 0)),
                pl.BlockSpec((1, 1), lambda n, j: (0, 0)),
            ],
            out_specs=out_specs,
        ),
        compiler_params=pltpu.CompilerParams(
            dimension_semantics=("parallel", "parallel"),
            vmem_limit_bytes=vmem_limit_bytes),
        cost_estimate=cost,
    )(x_flat, wf, bl, ba)

    if return_local:
        local_f, att_f, attd_f = outs
        return (local_f.reshape(N, LD, H, W),
                att_f.reshape(N, 1, H, W),
                attd_f.reshape(N, LD, H, W))
    att_f, attd_f = outs
    return (att_f.reshape(N, 1, H, W), attd_f.reshape(N, LD, H, W))


def _reference(x_nchw, w_local, b_local, w_att, b_att,
               compute_dtype=jnp.bfloat16):
    """Plain-JAX reference mirroring the PyTorch module (bf16 matmul operands,
    f32 accumulation / epilogue — same numerics as the kernel)."""
    xc = x_nchw.astype(compute_dtype).astype(jnp.float32)
    wlc = w_local.astype(compute_dtype).astype(jnp.float32)
    wac = w_att.astype(compute_dtype).astype(jnp.float32)
    hi = jax.lax.Precision.HIGHEST
    local = (jnp.einsum('nchw,dc->ndhw', xc, wlc, precision=hi)
             + b_local[None, :, None, None])
    att = jax.nn.sigmoid(jnp.einsum('nchw,dc->ndhw', xc, wac, precision=hi)
                         + b_att[None, :, None, None])
    attd = local * att
    return local, att, attd


if __name__ == "__main__":
    # Small deterministic setup consistent with the module's __init__.
    N, C, H, W = 2, 4, 16, 16      # input_dim = 4
    LOCAL_DIM = 32                 # local_dim (scaled down from 1024)

    key = jax.random.PRNGKey(0)
    kx, kwl, kbl, kwa, kba = jax.random.split(key, 5)

    x = jax.random.normal(kx, (N, C, H, W), dtype=jnp.float32)
    # Conv2d(input_dim, local_dim, 1): weight (LD, C, 1, 1) -> squeeze to (LD, C)
    w_local = jax.random.normal(kwl, (LOCAL_DIM, C), dtype=jnp.float32) * 0.1
    b_local = jax.random.normal(kbl, (LOCAL_DIM,), dtype=jnp.float32) * 0.1
    # Conv2d(input_dim, 1, 1): weight (1, C, 1, 1) -> (1, C)
    w_att = jax.random.normal(kwa, (1, C), dtype=jnp.float32) * 0.1
    b_att = jax.random.normal(kba, (1,), dtype=jnp.float32) * 0.1

    ref_local, ref_att, ref_attd = _reference(x, w_local, b_local, w_att, b_att)

    # 1) Default path: full PyTorch contract (three outputs, input dtype).
    local_f, att_map, attd_f = local_feature_extractor(
        x, w_local, b_local, w_att, b_att)
    jax.block_until_ready((local_f, att_map, attd_f))
    assert local_f.shape == (N, LOCAL_DIM, H, W)
    assert att_map.shape == (N, 1, H, W)
    assert attd_f.shape == (N, LOCAL_DIM, H, W)
    assert jnp.allclose(local_f, ref_local, atol=1e-4, rtol=1e-4)
    assert jnp.allclose(att_map, ref_att, atol=1e-4, rtol=1e-4)
    assert jnp.allclose(attd_f, ref_attd, atol=1e-4, rtol=1e-4)

    # 2) Write-reduced path: skip local_features output (typical DELG usage).
    att2, attd2 = local_feature_extractor(
        x, w_local, b_local, w_att, b_att, return_local=False)
    jax.block_until_ready((att2, attd2))
    assert jnp.allclose(att2, ref_att, atol=1e-4, rtol=1e-4)
    assert jnp.allclose(attd2, ref_attd, atol=1e-4, rtol=1e-4)

    # 3) Narrow-output path: bf16 outputs halve HBM write traffic.
    local_b, att_b, attd_b = local_feature_extractor(
        x, w_local, b_local, w_att, b_att, out_dtype=jnp.bfloat16)
    jax.block_until_ready((local_b, att_b, attd_b))
    assert jnp.allclose(local_b.astype(jnp.float32), ref_local,
                        atol=2e-2, rtol=2e-2)
    assert jnp.allclose(att_b.astype(jnp.float32), ref_att,
                        atol=2e-2, rtol=2e-2)
    assert jnp.allclose(attd_b.astype(jnp.float32), ref_attd,
                        atol=2e-2, rtol=2e-2)

    print("KERNEL_OK")
</pallas_src>

<mosaic_0001>
module attributes {stable_mosaic.version = 11 : i64} {
  func.func @kernel(%arg0: i32, %arg1: i32, %arg2: memref<1x4x128xf32, #tpu.memory_space<vmem>>, %arg3: memref<40x4xbf16, #tpu.memory_space<vmem>>, %arg4: memref<32x1xf32, #tpu.memory_space<vmem>>, %arg5: memref<1x1xf32, #tpu.memory_space<vmem>>, %arg6: memref<1x32x128xf32, #tpu.memory_space<vmem>>, %arg7: memref<1x1x128xf32, #tpu.memory_space<vmem>>, %arg8: memref<1x32x128xf32, #tpu.memory_space<vmem>>) attributes {dimension_semantics = [#tpu.dimension_semantics<parallel>, #tpu.dimension_semantics<parallel>], iteration_bounds = array<i64: 2, 2>, scalar_prefetch = 0 : i64, scratch_operands = 0 : i64, tpu.core_type = #tpu.core_type<tc>, window_params = [{transform_indices = @transform_0, window_bounds = array<i64: 1, 4, 128>}, {pipeline_mode = #tpu.pipeline_mode<synchronous>, transform_indices = @transform_1, window_bounds = array<i64: 40, 4>}, {pipeline_mode = #tpu.pipeline_mode<synchronous>, transform_indices = @transform_2, window_bounds = array<i64: 32, 1>}, {pipeline_mode = #tpu.pipeline_mode<synchronous>, transform_indices = @transform_3, window_bounds = array<i64: 1, 1>}, {transform_indices = @transform_4, window_bounds = array<i64: 1, 32, 128>}, {transform_indices = @transform_5, window_bounds = array<i64: 1, 1, 128>}, {transform_indices = @transform_6, window_bounds = array<i64: 1, 32, 128>}]} {
    %c0 = arith.constant 0 : index
    %c0_0 = arith.constant 0 : index
    %c0_1 = arith.constant 0 : index
    %0 = vector.load %arg2[%c0, %c0_0, %c0_1] : memref<1x4x128xf32, #tpu.memory_space<vmem>>, vector<1x4x128xf32>
    %1 = vector.shape_cast %0 : vector<1x4x128xf32> to vector<4x128xf32>
    %2 = arith.truncf %1 : vector<4x128xf32> to vector<4x128xbf16>
    %c0_2 = arith.constant 0 : index
    %c0_3 = arith.constant 0 : index
    %3 = vector.load %arg3[%c0_2, %c0_3] : memref<40x4xbf16, #tpu.memory_space<vmem>>, vector<40x4xbf16>
    %cst = arith.constant dense<0.000000e+00> : vector<40x128xf32>
    %4 = tpu.matmul %3, %2, %cst {dimension_numbers = #tpu.dot_dimension_numbers<[1], [0], [0], [1], [0, 0, 1, 1], [], []>} : vector<40x4xbf16>, vector<4x128xbf16>, vector<40x128xf32> -> vector<40x128xf32>
    %5 = vector.extract_strided_slice %4 {offsets = [0, 0], sizes = [32, 128], strides = [1, 1]} : vector<40x128xf32> to vector<32x128xf32>
    %c0_4 = arith.constant 0 : index
    %c0_5 = arith.constant 0 : index
    %6 = vector.load %arg4[%c0_4, %c0_5] : memref<32x1xf32, #tpu.memory_space<vmem>>, vector<32x1xf32>
    %7 = vector.broadcast %6 : vector<32x1xf32> to vector<32x128xf32>
    %8 = arith.addf %5, %7 : vector<32x128xf32>
    %9 = vector.extract_strided_slice %4 {offsets = [32, 0], sizes = [1, 128], strides = [1, 1]} : vector<40x128xf32> to vector<1x128xf32>
    %c0_6 = arith.constant 0 : index
    %c0_7 = arith.constant 0 : index
    %10 = vector.load %arg5[%c0_6, %c0_7] : memref<1x1xf32, #tpu.memory_space<vmem>>, vector<1x1xf32>
    %11 = vector.broadcast %10 : vector<1x1xf32> to vector<1x128xf32>
    %12 = arith.addf %9, %11 : vector<1x128xf32>
    %13 = arith.negf %12 : vector<1x128xf32>
    %14 = math.exp %13 : vector<1x128xf32>
    %cst_8 = arith.constant 1.000000e+00 : f32
    %15 = vector.broadcast %cst_8 : f32 to vector<1x128xf32>
    %16 = arith.addf %15, %14 : vector<1x128xf32>
    %17 = arith.divf %15, %16 : vector<1x128xf32>
    %c0_9 = arith.constant 0 : index
    %c0_10 = arith.constant 0 : index
    %c0_11 = arith.constant 0 : index
    %18 = vector.load %arg6[%c0_9, %c0_10, %c0_11] : memref<1x32x128xf32, #tpu.memory_space<vmem>>, vector<1x32x128xf32>
    %19 = vector.shape_cast %18 : vector<1x32x128xf32> to vector<32x128xf32>
    %20 = vector.shape_cast %8 : vector<32x128xf32> to vector<1x32x128xf32>
    tpu.vector_store %arg6[%c0_9, %c0_10, %c0_11], %20 {strides = array<i32>} : memref<1x32x128xf32, #tpu.memory_space<vmem>>, vector<1x32x128xf32>,
    %c0_12 = arith.constant 0 : index
    %c0_13 = arith.constant 0 : index
    %c0_14 = arith.constant 0 : index
    %21 = vector.load %arg7[%c0_12, %c0_13, %c0_14] : memref<1x1x128xf32, #tpu.memory_space<vmem>>, vector<1x1x128xf32>
    %22 = vector.shape_cast %21 : vector<1x1x128xf32> to vector<1x128xf32>
    %23 = vector.shape_cast %17 : vector<1x128xf32> to vector<1x1x128xf32>
    tpu.vector_store %arg7[%c0_12, %c0_13, %c0_14], %23 {strides = array<i32>} : memref<1x1x128xf32, #tpu.memory_space<vmem>>, vector<1x1x128xf32>,
    %24 = vector.broadcast %17 : vector<1x128xf32> to vector<32x128xf32>
    %25 = arith.mulf %8, %24 : vector<32x128xf32>
    %c0_15 = arith.constant 0 : index
    %c0_16 = arith.constant 0 : index
    %c0_17 = arith.constant 0 : index
    %26 = vector.load %arg8[%c0_15, %c0_16, %c0_17] : memref<1x32x128xf32, #tpu.memory_space<vmem>>, vector<1x32x128xf32>
    %27 = vector.shape_cast %26 : vector<1x32x128xf32> to vector<32x128xf32>
    %28 = vector.shape_cast %25 : vector<32x128xf32> to vector<1x32x128xf32>
    tpu.vector_store %arg8[%c0_15, %c0_16, %c0_17], %28 {strides = array<i32>} : memref<1x32x128xf32, #tpu.memory_space<vmem>>, vector<1x32x128xf32>,
    return
  }
  func.func @transform_0(%arg0: i32, %arg1: i32) -> (i32, i32, i32) {
    %c0_i32 = arith.constant 0 : i32
    %c0_i32_0 = arith.constant 0 : i32
    return %arg0, %c0_i32, %arg1 : i32, i32, i32
  }
  func.func @transform_1(%arg0: i32, %arg1: i32) -> (i32, i32) {
    %c0_i32 = arith.constant 0 : i32
    %c0_i32_0 = arith.constant 0 : i32
    %c0_i32_1 = arith.constant 0 : i32
    return %c0_i32, %c0_i32_0 : i32, i32
  }
  func.func @transform_2(%arg0: i32, %arg1: i32) -> (i32, i32) {
    %c0_i32 = arith.constant 0 : i32
    %c0_i32_0 = arith.constant 0 : i32
    %c0_i32_1 = arith.constant 0 : i32
    return %c0_i32, %c0_i32_0 : i32, i32
  }
  func.func @transform_3(%arg0: i32, %arg1: i32) -> (i32, i32) {
    %c0_i32 = arith.constant 0 : i32
    %c0_i32_0 = arith.constant 0 : i32
    %c0_i32_1 = arith.constant 0 : i32
    return %c0_i32, %c0_i32_0 : i32, i32
  }
  func.func @transform_4(%arg0: i32, %arg1: i32) -> (i32, i32, i32) {
    %c0_i32 = arith.constant 0 : i32
    %c0_i32_0 = arith.constant 0 : i32
    return %arg0, %c0_i32, %arg1 : i32, i32, i32
  }
  func.func @transform_5(%arg0: i32, %arg1: i32) -> (i32, i32, i32) {
    %c0_i32 = arith.constant 0 : i32
    %c0_i32_0 = arith.constant 0 : i32
    return %arg0, %c0_i32, %arg1 : i32, i32, i32
  }
  func.func @transform_6(%arg0: i32, %arg1: i32) -> (i32, i32, i32) {
    %c0_i32 = arith.constant 0 : i32
    %c0_i32_0 = arith.constant 0 : i32
    return %arg0, %c0_i32, %arg1 : i32, i32, i32
  }
}

</mosaic_0001>

<llo_original>
// kernel: tpu_custom_call.1
$region0: #{tpu_custom_call.1}
  #allocation0 [shape = 'u32[]', space=smem, size = 0x4, offset = 0x4, fixed_abs, tag = 'smem constant byte address 0x4 - core index']
  #allocation1 [shape = 'u32[72,128]{1,0:T(1,128)}', space=vmem, size = 0x9000, scoped, tag = 'internal scratch']
  #allocation2 [shape = 'f32[1,1]{1,0:T(1,128)S(1)}', space=vmem, size = 0x200, scoped, tag = 'scoped memory for tpu_custom_call.1']
  %s0 = inlined_call_operand.vmem [shape: f32[2,4,256], index: 0, kind: input, shape index: {}]
  %s1 = inlined_call_operand.vmem [shape: bf16[40,4], index: 1, kind: input, shape index: {}]
  %s2 = inlined_call_operand.vmem [shape: f32[32,1], index: 2, kind: input, shape index: {}]
  %s3 = inlined_call_operand.<no memory space> [shape: f32[1,1], index: 3, kind: input, shape index: {}]
  %s4 = inlined_call_operand.hbm [shape: f32[2,32,256], index: 4, kind: output, shape index: {0}]
  %s5 = inlined_call_operand.hbm [shape: f32[2,1,256], index: 5, kind: output, shape index: {1}]
  %s6 = inlined_call_operand.hbm [shape: f32[2,32,256], index: 6, kind: output, shape index: {2}]
  %7 = xla_tuple %s4, %s5, %s6
  %s8 = sld [smem:[#allocation0]]
  $region65: #{tpu_custom_call.1} parent=0
    _
  %s10 = ssub.s32 1, %s8
  %s11 = scalar_select 0, %s10, %s8
  %v12 = vstv %s3
  %13 = vst [vmem:[#allocation2] sm:$0x1] %v12
  $region1: #{tpu_custom_call.1} parent=0
    #allocation3 [shape = 'u8[32768]{0}', space=vmem, size = 0x8000, scoped, tag = 'output window, operand 0']
    #allocation4 [shape = 's32[2]{0}', space=sflag, size = 0x8, scoped, tag = 'scoped memory for tpu_custom_call.1']
    #allocation5 [shape = 'u8[1024]{0}', space=vmem, size = 0x400, scoped, tag = 'output window, operand 1']
    #allocation6 [shape = 's32[2]{0}', space=sflag, size = 0x8, scoped, tag = 'scoped memory for tpu_custom_call.1']
    #allocation7 [shape = 'u8[32768]{0}', space=vmem, size = 0x8000, scoped, tag = 'output window, operand 2']
    %14 = vsyncpa [#allocation4], 0
    %s15 = scalar_lea.sflag [#allocation4], 1
    %16 = vsyncpa %s15, 0
    %17 = vsyncpa [#allocation6], 0
    %s18 = scalar_lea.sflag [#allocation6], 1
    %19 = vsyncpa %s18, 0
    loop: start=0, step=1, limit=6
    $region2: #{tpu_custom_call.1} parent=1 // loop_pre_header
      _
    $region3: #{tpu_custom_call.1} parent=1 // loop_header
      %s21 = sphi 0, %s25
      %p22 = scmp.ge.s32.totalorder %s21, 6
      %s28 = sphi 0, %s40
      %s29 = sphi 0, %s36
      %s30 = sphi 0, %s28
      %s31 = sphi 0, %s29
      %s32 = sphi 0, %s30
      %s33 = sphi 0, %s31
      %s45 = sphi 0, %s47
      %s48 = sphi 0, %s45
      %s49 = sphi 0, %s48
      %s65 = sphi 0, %s49
      %s69 = sphi 0, %s69
      %s71 = sphi 0, %s69
      %s72 = sphi 0, %s71
      %s86 = sphi 0, %s72
      %s90 = sphi 0, %s90
      %s92 = sphi 0, %s90
      %s93 = sphi 0, %s92
      %s107 = sphi 0, %s93
      %s111 = sphi 0, %s111
      %s113 = sphi 0, %s111
      %s114 = sphi 0, %s113
      %s128 = sphi 0, %s114
      %s136 = sphi 0, %s138
      %s139 = sphi 0, %s136
      %s140 = sphi 0, %s139
      %s156 = sphi 0, %s140
      %s164 = sphi 0, %s166
      %s167 = sphi 0, %s164
      %s168 = sphi 0, %s167
      %s184 = sphi 0, %s168
      %s192 = sphi 0, %s194
      %s195 = sphi 0, %s192
      %s196 = sphi 0, %s195
      %s212 = sphi 0, %s196
    $region4: #{tpu_custom_call.1} parent=1 // loop_header_branch
      %24 = sbr.rel (%p22) target = $region8
    $region5: #{tpu_custom_call.1} parent=1 // loop_body
      %s26 = ssub.s32 %s21, 1
      %s27 = ssub.s32 %s21, 2
      %s34 = sadd.s32 1, %s29
      %p35 = scmp.ge.s32.totalorder %s34, 2
      %s36 = scalar_select %p35, 0, %s34
      %s37 = sadd.s32 1, %s28
      %s38 = scalar_select %p35, %s37, %s28
      %p39 = scmp.ge.s32.totalorder %s38, 2
      %s40 = scalar_select %p39, 0, %s38
      %s41 = ssub.s32 %s28, %s40
      %s42 = ssub.s32 %s29, %s36
      %s43 = sor.u32 %s41, %s42
      %p44 = scmp.eq.s32.totalorder %s43, 0
      %s46 = sadd.s32 %s45, 1
      %s47 = scalar_select %p44, %s45, %s46
      %p50 = pneg %p44
      %p51 = scmp.eq.s32.totalorder %s21, 3
      %p52 = por %p50, %p51
      %p53 = scmp.ne.s32.totalorder %s45, %s48
      %p54 = scmp.eq.s32.totalorder %s21, 0
      %p55 = por %p53, %p54
      %p56 = scmp.ne.s32.totalorder %s45, %s48
      %p57 = scmp.eq.s32.totalorder %s26, 3
      %p58 = por %p56, %p57
      %p59 = scmp.ne.s32.totalorder %s48, %s49
      %p60 = scmp.eq.s32.totalorder %s26, 0
      %p61 = por %p59, %p60
      %p62 = scmp.ne.s32.totalorder %s48, %s49
      %p63 = scmp.eq.s32.totalorder %s27, 3
      %p64 = por %p62, %p63
      %p66 = scmp.ne.s32.totalorder %s49, %s65
      %p67 = scmp.eq.s32.totalorder %s27, 0
      %p68 = por %p66, %p67
      %s70 = sadd.s32 %s69, 1
      %p73 = scmp.eq.s32.totalorder %s21, 3
      %p74 = scmp.ne.s32.totalorder %s69, %s71
      %p75 = scmp.eq.s32.totalorder %s21, 0
      %p76 = por %p74, %p75
      %p77 = scmp.ne.s32.totalorder %s69, %s71
      %p78 = scmp.eq.s32.totalorder %s26, 3
      %p79 = por %p77, %p78
      %p80 = scmp.ne.s32.totalorder %s71, %s72
      %p81 = scmp.eq.s32.totalorder %s26, 0
      %p82 = por %p80, %p81
      %p83 = scmp.ne.s32.totalorder %s71, %s72
      %p84 = scmp.eq.s32.totalorder %s27, 3
      %p85 = por %p83, %p84
      %p87 = scmp.ne.s32.totalorder %s72, %s86
      %p88 = scmp.eq.s32.totalorder %s27, 0
      %p89 = por %p87, %p88
      %s91 = sadd.s32 %s90, 1
      %p94 = scmp.eq.s32.totalorder %s21, 3
      %p95 = scmp.ne.s32.totalorder %s90, %s92
      %p96 = scmp.eq.s32.totalorder %s21, 0
      %p97 = por %p95, %p96
      %p98 = scmp.ne.s32.totalorder %s90, %s92
      %p99 = scmp.eq.s32.totalorder %s26, 3
      %p100 = por %p98, %p99
      %p101 = scmp.ne.s32.totalorder %s92, %s93
      %p102 = scmp.eq.s32.totalorder %s26, 0
      %p103 = por %p101, %p102
      %p104 = scmp.ne.s32.totalorder %s92, %s93
      %p105 = scmp.eq.s32.totalorder %s27, 3
      %p106 = por %p104, %p105
      %p108 = scmp.ne.s32.totalorder %s93, %s107
      %p109 = scmp.eq.s32.totalorder %s27, 0
      %p110 = por %p108, %p109
      %s112 = sadd.s32 %s111, 1
      %p115 = scmp.eq.s32.totalorder %s21, 3
      %p116 = scmp.ne.s32.totalorder %s111, %s113
      %p117 = scmp.eq.s32.totalorder %s21, 0
      %p118 = por %p116, %p117
      %p119 = scmp.ne.s32.totalorder %s111, %s113
      %p120 = scmp.eq.s32.totalorder %s26, 3
      %p121 = por %p119, %p120
      %p122 = scmp.ne.s32.totalorder %s113, %s114
      %p123 = scmp.eq.s32.totalorder %s26, 0
      %p124 = por %p122, %p123
      %p125 = scmp.ne.s32.totalorder %s113, %s114
      %p126 = scmp.eq.s32.totalorder %s27, 3
      %p127 = por %p125, %p126
      %p129 = scmp.ne.s32.totalorder %s114, %s128
      %p130 = scmp.eq.s32.totalorder %s27, 0
      %p131 = por %p129, %p130
      %s132 = ssub.s32 %s28, %s40
      %s133 = ssub.s32 %s29, %s36
      %s134 = sor.u32 %s132, %s133
      %p135 = scmp.eq.s32.totalorder %s134, 0
      %s137 = sadd.s32 %s136, 1
      %s138 = scalar_select %p135, %s136, %s137
      %p141 = pneg %p135
      %p142 = scmp.eq.s32.totalorder %s21, 3
      %p143 = por %p141, %p142
      %p144 = scmp.ne.s32.totalorder %s136, %s139
      %p145 = scmp.eq.s32.totalorder %s21, 0
      %p146 = por %p144, %p145
      %p147 = scmp.ne.s32.totalorder %s136, %s139
      %p148 = scmp.eq.s32.totalorder %s26, 3
      %p149 = por %p147, %p148
      %p150 = scmp.ne.s32.totalorder %s139, %s140
      %p151 = scmp.eq.s32.totalorder %s26, 0
      %p152 = por %p150, %p151
      %p153 = scmp.ne.s32.totalorder %s139, %s140
      %p154 = scmp.eq.s32.totalorder %s27, 3
      %p155 = por %p153, %p154
      %p157 = scmp.ne.s32.totalorder %s140, %s156
      %p158 = scmp.eq.s32.totalorder %s27, 0
      %p159 = por %p157, %p158
      %s160 = ssub.s32 %s28, %s40
      %s161 = ssub.s32 %s29, %s36
      %s162 = sor.u32 %s160, %s161
      %p163 = scmp.eq.s32.totalorder %s162, 0
      %s165 = sadd.s32 %s164, 1
      %s166 = scalar_select %p163, %s164, %s165
      %p169 = pneg %p163
      %p170 = scmp.eq.s32.totalorder %s21, 3
      %p171 = por %p169, %p170
      %p172 = scmp.ne.s32.totalorder %s164, %s167
      %p173 = scmp.eq.s32.totalorder %s21, 0
      %p174 = por %p172, %p173
      %p175 = scmp.ne.s32.totalorder %s164, %s167
      %p176 = scmp.eq.s32.totalorder %s26, 3
      %p177 = por %p175, %p176
      %p178 = scmp.ne.s32.totalorder %s167, %s168
      %p179 = scmp.eq.s32.totalorder %s26, 0
      %p180 = por %p178, %p179
      %p181 = scmp.ne.s32.totalorder %s167, %s168
      %p182 = scmp.eq.s32.totalorder %s27, 3
      %p183 = por %p181, %p182
      %p185 = scmp.ne.s32.totalorder %s168, %s184
      %p186 = scmp.eq.s32.totalorder %s27, 0
      %p187 = por %p185, %p186
      %s188 = ssub.s32 %s28, %s40
      %s189 = ssub.s32 %s29, %s36
      %s190 = sor.u32 %s188, %s189
      %p191 = scmp.eq.s32.totalorder %s190, 0
      %s193 = sadd.s32 %s192, 1
      %s194 = scalar_select %p191, %s192, %s193
      %p197 = pneg %p191
      %p198 = scmp.eq.s32.totalorder %s21, 3
      %p199 = por %p197, %p198
      %p200 = scmp.ne.s32.totalorder %s192, %s195
      %p201 = scmp.eq.s32.totalorder %s21, 0
      %p202 = por %p200, %p201
      %p203 = scmp.ne.s32.totalorder %s192, %s195
      %p204 = scmp.eq.s32.totalorder %s26, 3
      %p205 = por %p203, %p204
      %p206 = scmp.ne.s32.totalorder %s195, %s196
      %p207 = scmp.eq.s32.totalorder %s26, 0
      %p208 = por %p206, %p207
      %p209 = scmp.ne.s32.totalorder %s195, %s196
      %p210 = scmp.eq.s32.totalorder %s27, 3
      %p211 = por %p209, %p210
      %p213 = scmp.ne.s32.totalorder %s196, %s212
      %p214 = scmp.eq.s32.totalorder %s27, 0
      %p215 = por %p213, %p214
      %p216 = scmp.le.s32.totalorder 1, %s21
      %p217 = scmp.lt.s32.totalorder %s21, 5
      %p218 = pnand %p216, %p217
      %p219 = pneg %p218
      // Predicated region
      $region9: #{tpu_custom_call.1} parent=5 // pred_check
        _
      $region10: #{tpu_custom_call.1} parent=5 // pred_check_branch
        %221 = sbr.rel (%p218) target = $region12
      $region11: #{tpu_custom_call.1} parent=5 // pred_region
        %s222 = ssub.s32 %s21, 1
        // Predicated region
        $region13: #{tpu_custom_call.1} parent=11 // pred_check
          %p223 = pneg %p82
        $region14: #{tpu_custom_call.1} parent=11 // pred_check_branch
          %225 = sbr.rel (%p223) target = $region16
        $region15: #{tpu_custom_call.1} parent=11 // pred_region
          _
        $region16: #{tpu_custom_call.1} parent=11 // pred_fallthru
          _
        // Predicated region
        $region17: #{tpu_custom_call.1} parent=11 // pred_check
          %p226 = pneg %p103
        $region18: #{tpu_custom_call.1} parent=11 // pred_check_branch
          %228 = sbr.rel (%p226) target = $region20
        $region19: #{tpu_custom_call.1} parent=11 // pred_region
          _
        $region20: #{tpu_custom_call.1} parent=11 // pred_fallthru
          _
        // Predicated region
        $region21: #{tpu_custom_call.1} parent=11 // pred_check
          %p229 = pneg %p124
        $region22: #{tpu_custom_call.1} parent=11 // pred_check_branch
          %231 = sbr.rel (%p229) target = $region24
        $region23: #{tpu_custom_call.1} parent=11 // pred_region
          _
        $region24: #{tpu_custom_call.1} parent=11 // pred_fallthru
          _
      $region12: #{tpu_custom_call.1} parent=5 // pred_fallthru
        _
      %p232 = scmp.lt.s32.totalorder %s21, 4
      // Predicated region
      $region25: #{tpu_custom_call.1} parent=5 // pred_check
        %p233 = pneg %p232
      $region26: #{tpu_custom_call.1} parent=5 // pred_check_branch
        %235 = sbr.rel (%p233) target = $region28
      $region27: #{tpu_custom_call.1} parent=5 // pred_region
        // Predicated region
        $region29: #{tpu_custom_call.1} parent=27 // pred_check
          %p236 = pneg %p55
        $region30: #{tpu_custom_call.1} parent=27 // pred_check_branch
          %238 = sbr.rel (%p236) target = $region32
        $region31: #{tpu_custom_call.1} parent=27 // pred_region
          %p239 = scmp.lt.s32.totalorder %s28, 1
          %s240 = scalar_select %p239, %s28, 1
          %p241 = scmp.lt.s32.totalorder %s29, 1
          %s242 = scalar_select %p241, %s29, 1
          %s243 = smul.addr %s240, 2
          %s244 = sadd.s32 %s242, %s243
          %s245 = smul.addr %s244, 4
          %s246 = scalar_lea.vmem %s0, %s245
        $region32: #{tpu_custom_call.1} parent=27 // pred_fallthru
          _
      $region28: #{tpu_custom_call.1} parent=5 // pred_fallthru
        _
      %p247 = scmp.le.s32.totalorder 1, %s21
      %p248 = scmp.lt.s32.totalorder %s21, 5
      %p249 = pnand %p247, %p248
      %p250 = pneg %p249
      // Predicated region
      $region33: #{tpu_custom_call.1} parent=5 // pred_check
        _
      $region34: #{tpu_custom_call.1} parent=5 // pred_check_branch
        %252 = sbr.rel (%p249) target = $region36
      $region35: #{tpu_custom_call.1} parent=5 // pred_region
        %s253 = ssub.s32 %s21, 1
        %p254 = scmp.lt.s32.totalorder %s30, 1
        %s255 = scalar_select %p254, %s30, 1
        %p256 = scmp.lt.s32.totalorder %s31, 1
        %s257 = scalar_select %p256, %s31, 1
        %s258 = smul.addr %s255, 2
        %s259 = sadd.s32 %s257, %s258
        %s260 = smul.addr %s259, 4
        %s261 = scalar_lea.vmem %s0, %s260
        %p262 = pneg %p61
        %p263 = pneg %p58
        %p264 = pneg %p82
        %p265 = pneg %p79
        %p266 = pneg %p103
        %p267 = pneg %p100
        %p268 = pneg %p124
        %p269 = pneg %p121
        %p270 = pneg %p152
        %p271 = pneg %p149
        %s272 = sand.u32 %s139, 1
        %s273 = scalar_lea.sflag [#allocation4], %s272
        %s274 = sand.u32 %s139, 1
        %s275 = smul.addr %s274, 32
        %s276 = scalar_lea.vmem [#allocation3], %s275
        %p277 = pneg %p180
        %p278 = pneg %p177
        %s279 = sand.u32 %s26, 1
        %s280 = scalar_lea.sflag [#allocation6], %s279
        %s281 = sand.u32 %s167, 1
        %s282 = scalar_lea.vmem [#allocation5], %s281
        %p283 = pneg %p208
        %p284 = pneg %p205
        %s285 = sand.u32 %s26, 1
        %s286 = scalar_lea.sflag [#allocation6], %s285
        %s287 = sand.u32 %s195, 1
        %s288 = smul.addr %s287, 32
        %s289 = scalar_lea.vmem [#allocation7], %s288
        %p290 = scmp.lt.s32.totalorder %s30, 1
        %s291 = scalar_select %p290, %s30, 1
        %p292 = scmp.lt.s32.totalorder %s31, 1
        %s293 = scalar_select %p292, %s31, 1
        %s294 = smul.addr %s291, 2
        %s295 = sadd.s32 %s293, %s294
        %s296 = smul.addr %s295, 4
        %s297 = scalar_lea.vmem %s0, %s296
        %v299 = vld [vmem:[%s297] sm:$0xf]
        %v300 = vpack.c.bf16 %v299, %v299
        %v301 = vld [vmem:[%s1] sm:$0xf]
        %v302 = vld [vmem:[%s1 + $0x4] sm:$0xf]
        %v303 = vld [vmem:[%s1 + $0x8] sm:$0xf]
        %v304 = vld [vmem:[%s1 + $0xc] sm:$0xf]
        %v305 = vld [vmem:[%s1 + $0x10] sm:$0xf]
        %v311 = vunpack.c.l.b16 %v301
        %v312 = vunpack.c.l.b16 %v302
        %v313 = vunpack.c.l.b16 %v303
        %v314 = vunpack.c.l.b16 %v304
        %v315 = vunpack.c.l.b16 %v305
        %v316 = vpack.c.b16 %v312, %v311
        %v317 = vpack.c.b16 %v314, %v313
        %v318 = vpack.c.b16 %v315, %v315
        %vm319 = vcmask 31744
        %v321 = vsel %vm319, %v316, 0
        %v324 = vsel %vm319, %v317, 0
        %v327 = vsel %vm319, %v318, 0
        %vm329 = vcmask 1041408
        %v331 = vsel %vm329, %v300, 0
        %333 = vmatpush.bf16.msra.mxu0 0
        %334 = vmatpush.bf16.msra.mxu0 0
        %335 = vmatpush.bf16.msra.mxu0 0
        %336 = vmatpush.bf16.msra.mxu0 0
        %337 = vmatpush.bf16.msra.mxu0 0
        %338 = vmatpush.bf16.msra.mxu0 0
        %339 = vmatpush.bf16.msra.mxu0 0
        %340 = vmatpush.bf16.msra.mxu0 %v331
        %341 = vmatmul.bf16.gmra.mxu0 %v321
        %v342 = vpop.f32.mrf.mxu0
        %v343 = vadd.f32 0.0, %v342
        %v344 = vpop.f32.mrf.mxu0
        %v345 = vadd.f32 0.0, %v344
        %346 = vmatmul.bf16.gmra.mxu0 %v324
        %v347 = vpop.f32.mrf.mxu0
        %v348 = vadd.f32 0.0, %v347
        %v349 = vpop.f32.mrf.mxu0
        %v350 = vadd.f32 0.0, %v349
        %351 = vmatmul.bf16.gmra.mxu0 %v327
        %v352 = vpop.f32.mrf.mxu0
        %v353 = vadd.f32 0.0, %v352
        %v354 = vpop.f32.mrf.mxu0
        %355 = vdwg.mxu0
        %v356 = vld [vmem:[%s2] sm:$0xff]
        %v357 = vld [vmem:[%s2 + $0x8] sm:$0xff]
        %v358 = vld [vmem:[%s2 + $0x10] sm:$0xff]
        %v359 = vld [vmem:[%s2 + $0x18] sm:$0xff]
        %361 = vset.pattern.permute.xlu0 0
        %362 = vperm.xlu0 %361, %v356
        %v363 = vpop.permute.xlu0 %362
        %366 = vset.pattern.permute.xlu0 0
        %367 = vperm.xlu0 %366, %v357
        %v368 = vpop.permute.xlu0 %367
        %371 = vset.pattern.permute.xlu0 0
        %372 = vperm.xlu0 %371, %v358
        %v373 = vpop.permute.xlu0 %372
        %376 = vset.pattern.permute.xlu0 0
        %377 = vperm.xlu0 %376, %v359
        %v378 = vpop.permute.xlu0 %377
        %v380 = vadd.f32 %v343, %v363
        %v381 = vadd.f32 %v345, %v368
        %v382 = vadd.f32 %v348, %v373
        %v383 = vadd.f32 %v350, %v378
        %v384 = vld [vmem:[#allocation2] sm:$0x1]
        %386 = vset.pattern.permute.xlu0 0
        %387 = vperm.xlu0 %386, %v384
        %v388 = vpop.permute.xlu0 %387
        %v390 = vperm.slane %v388, 0
        %v391 = vadd.f32 %v353, %v390
        %v392 = vxor.u32 %v391, 2147483648
        %v393 = vmul.f32 %v392, 1.442695
        %v394 = vpow.pop %v393
        %v395 = vadd.f32 %v394, 1.0
        %v396 = vrcp.pop %v395
        %v397 = vmul.f32 %v395, %v396
        %v398 = vsub.f32 1.0, %v397
        %v399 = vmul.f32 %v396, %v398
        %v400 = vadd.f32 %v396, %v399
        %vm401 = vweird.f32 %v395
        %vm402 = vweird.f32 %v396
        %vm403 = vmor %vm401, %vm402
        %v404 = vsel %vm403, %v396, %v400
        %v405 = vand.u32 2147483647, %v395
        %vm406 = vcmp.eq.f32.partialorder %v405, 8.507059e+37
        %v407 = vand.u32 %v395, 2147483648
        %v408 = vor.u32 1.1754944e-38, %v407
        %v409 = vsel %vm406, %v408, %v404
        %v410 = vmul.f32 1.0, %v409
        %411 = vst [vmem:[%s276] sm:$0xff] %v380
        %412 = vst [vmem:[%s276 + $0x8] sm:$0xff] %v381
        %413 = vst [vmem:[%s276 + $0x10] sm:$0xff] %v382
        %414 = vst [vmem:[%s276 + $0x18] sm:$0xff] %v383
        %415 = vst [vmem:[%s282] sm:$0x1] %v410
        %v416 = vperm.slane %v410, 0
        %v417 = vmul.f32 %v380, %v416
        %v418 = vmul.f32 %v381, %v416
        %v419 = vmul.f32 %v382, %v416
        %v420 = vmul.f32 %v383, %v416
        %421 = vst [vmem:[%s289] sm:$0xff] %v417
        %422 = vst [vmem:[%s289 + $0x8] sm:$0xff] %v418
        %423 = vst [vmem:[%s289 + $0x10] sm:$0xff] %v419
        %424 = vst [vmem:[%s289 + $0x18] sm:$0xff] %v420
        %s425 = sand.u32 %s139, 1
        %s426 = scalar_lea.sflag [#allocation4], %s425
        %s427 = sand.u32 %s139, 1
        %s428 = smul.addr %s427, 32
        %s429 = scalar_lea.vmem [#allocation3], %s428
        %s430 = sand.u32 %s26, 1
        %s431 = scalar_lea.sflag [#allocation6], %s430
        %s432 = sand.u32 %s167, 1
        %s433 = scalar_lea.vmem [#allocation5], %s432
        %s434 = sand.u32 %s26, 1
        %s435 = scalar_lea.sflag [#allocation6], %s434
        %s436 = sand.u32 %s195, 1
        %s437 = smul.addr %s436, 32
        %s438 = scalar_lea.vmem [#allocation7], %s437
        // Predicated region
        $region37: #{tpu_custom_call.1} parent=35 // pred_check
          %p439 = pneg %p149
        $region38: #{tpu_custom_call.1} parent=35 // pred_check_branch
          %441 = sbr.rel (%p439) target = $region40
        $region39: #{tpu_custom_call.1} parent=35 // pred_region
          %443 = vsyncadd %s426, 0
          %s444 = smul.addr %s30, 8
          %s445 = sadd.s32 %s31, %s444
          %s446 = smul.addr %s445, 8
          %s447 = scalar_lea.hbm %s4, %s446
          %s448 = sshll.u32 %s429, 4
          %s449 = int_to_ptr.vmem [resolvable:$true] %s448
          %s450 = sshll.u32 %s447, 4
          %s451 = int_to_ptr.hbm [resolvable:$true] %s450
          %456 = dma.vmem_to_hbm [thread:$0]  %s449, 512, %s451, %s426, 128, 256, 8
        $region40: #{tpu_custom_call.1} parent=35 // pred_fallthru
          _
        // Predicated region
        $region41: #{tpu_custom_call.1} parent=35 // pred_check
          %p457 = pneg %p177
        $region42: #{tpu_custom_call.1} parent=35 // pred_check_branch
          %459 = sbr.rel (%p457) target = $region44
        $region43: #{tpu_custom_call.1} parent=35 // pred_region
          %461 = vsyncadd %s431, 0
          %s462 = smul.addr %s30, 2
          %s463 = sadd.s32 %s31, %s462
          %s464 = scalar_lea.hbm %s5, %s463
          %s466 = sshll.u32 %s433, 4
          %s467 = int_to_ptr.vmem [resolvable:$true] %s466
          %s468 = sshll.u32 %s464, 4
          %s469 = int_to_ptr.hbm [resolvable:$true] %s468
          %471 = dma.vmem_to_hbm [thread:$0]  %s467, 16, %s469, %s431
        $region44: #{tpu_custom_call.1} parent=35 // pred_fallthru
          _
        // Predicated region
        $region45: #{tpu_custom_call.1} parent=35 // pred_check
          %p472 = pneg %p205
        $region46: #{tpu_custom_call.1} parent=35 // pred_check_branch
          %474 = sbr.rel (%p472) target = $region48
        $region47: #{tpu_custom_call.1} parent=35 // pred_region
          %476 = vsyncadd %s435, 0
          %s477 = smul.addr %s30, 8
          %s478 = sadd.s32 %s31, %s477
          %s479 = smul.addr %s478, 8
          %s480 = scalar_lea.hbm %s6, %s479
          %s481 = sshll.u32 %s438, 4
          %s482 = int_to_ptr.vmem [resolvable:$true] %s481
          %s483 = sshll.u32 %s480, 4
          %s484 = int_to_ptr.hbm [resolvable:$true] %s483
          %489 = dma.vmem_to_hbm [thread:$0]  %s482, 512, %s484, %s435, 128, 256, 8
        $region48: #{tpu_custom_call.1} parent=35 // pred_fallthru
          _
      $region36: #{tpu_custom_call.1} parent=5 // pred_fallthru
        _
      %p490 = scmp.le.s32.totalorder 2, %s21
      // Predicated region
      $region49: #{tpu_custom_call.1} parent=5 // pred_check
        %p491 = pneg %p490
      $region50: #{tpu_custom_call.1} parent=5 // pred_check_branch
        %493 = sbr.rel (%p491) target = $region52
      $region51: #{tpu_custom_call.1} parent=5 // pred_region
        %s494 = ssub.s32 %s21, 2
        // Predicated region
        $region53: #{tpu_custom_call.1} parent=51 // pred_check
          %p495 = pneg %p155
        $region54: #{tpu_custom_call.1} parent=51 // pred_check_branch
          %497 = sbr.rel (%p495) target = $region56
        $region55: #{tpu_custom_call.1} parent=51 // pred_region
          %s498 = sand.u32 %s140, 1
          %s499 = scalar_lea.sflag [#allocation4], %s498
          %s500 = sand.u32 %s140, 1
          %s501 = smul.addr %s500, 32
          %s502 = scalar_lea.vmem [#allocation3], %s501
          %504 = dma.done %s499, 512
        $region56: #{tpu_custom_call.1} parent=51 // pred_fallthru
          _
        // Predicated region
        $region57: #{tpu_custom_call.1} parent=51 // pred_check
          %p505 = pneg %p183
        $region58: #{tpu_custom_call.1} parent=51 // pred_check_branch
          %507 = sbr.rel (%p505) target = $region60
        $region59: #{tpu_custom_call.1} parent=51 // pred_region
          %s508 = sand.u32 %s27, 1
          %s509 = scalar_lea.sflag [#allocation6], %s508
          %s510 = sand.u32 %s168, 1
          %s511 = scalar_lea.vmem [#allocation5], %s510
          %513 = dma.done %s509, 16
        $region60: #{tpu_custom_call.1} parent=51 // pred_fallthru
          _
        // Predicated region
        $region61: #{tpu_custom_call.1} parent=51 // pred_check
          %p514 = pneg %p211
        $region62: #{tpu_custom_call.1} parent=51 // pred_check_branch
          %516 = sbr.rel (%p514) target = $region64
        $region63: #{tpu_custom_call.1} parent=51 // pred_region
          %s517 = sand.u32 %s27, 1
          %s518 = scalar_lea.sflag [#allocation6], %s517
          %s519 = sand.u32 %s196, 1
          %s520 = smul.addr %s519, 32
          %s521 = scalar_lea.vmem [#allocation7], %s520
          %523 = dma.done %s518, 512
        $region64: #{tpu_custom_call.1} parent=51 // pred_fallthru
          _
      $region52: #{tpu_custom_call.1} parent=5 // pred_fallthru
        _
    $region6: #{tpu_custom_call.1} parent=1 // loop_footer
      %s25 = sadd.s32 1, %s21
    $region7: #{tpu_custom_call.1} parent=1 // loop_footer_branch
      %20 = sbr.rel target = $region3
    $region8: #{tpu_custom_call.1} parent=1 // loop_exit
      _
    %524 = vsyncpa [#allocation4], 1
    %s525 = scalar_lea.sflag [#allocation4], 1
    %526 = vsyncpa %s525, 1
    %527 = vsyncpa [#allocation6], 1
    %s528 = scalar_lea.sflag [#allocation6], 1
    %529 = vsyncpa %s528, 1

</llo_original>
